<compile_context>
chip_gen: v6e
topology: v6e:2x2x1
jax: 0.10.0
libtpu: 0.0.40
codegen_flags: <defaults>
</compile_context>

<pallas_src>
import jax
import jax.numpy as jnp
from jax.experimental import pallas as pl
from jax.experimental.pallas import tpu as pltpu
import numpy as np

# Sobel taps (pure-JAX reference only).
_SOBEL_X = ((-1.0, 0.0, 1.0), (-2.0, 0.0, 2.0), (-1.0, 0.0, 1.0))
_SOBEL_Y = ((-1.0, -2.0, -1.0), (0.0, 0.0, 0.0), (1.0, 2.0, 1.0))


# --------------------------------------------------------------------------
# Generation-aware VMEM budgets.
# --------------------------------------------------------------------------
def _vmem_capacity_bytes():
    try:
        cap = getattr(pltpu.get_tpu_info(), "vmem_capacity_bytes", None)
        if cap:
            return int(cap)
    except Exception:
        pass
    return 64 * 1024 * 1024                       # conservative (v7x-sized)


def _vmem_limit_bytes(cap):
    # <=48 MiB on v7x (64 MiB physical), up to 96 MiB on v5e/v6e (128 MiB).
    return max(32 * 1024 * 1024, min((cap * 3) // 4, 96 * 1024 * 1024))


def _block_bytes_budget(cap):
    # Multi-MiB blocks reach 85%+ of HBM roofline; keep smaller on v7x.
    return 3 * 1024 * 1024 if cap <= 64 * 1024 * 1024 else 6 * 1024 * 1024


# --------------------------------------------------------------------------
# Tile selection: byte-budgeted row strips (preferred) or channel tiles.
# --------------------------------------------------------------------------
def _largest_div_multiple_of(n, step, cap):
    """Largest divisor of n that is a multiple of `step` and <= cap (or None)."""
    cap = min((cap // step) * step, (n // step) * step)
    for t in range(cap, step - 1, -step):
        if n % t == 0:
            return t
    return None


def _pick_tiles(c, h, w, budget):
    """Return (tc, th) so a (tc, th, w) f32 block stays near `budget` bytes."""
    if c * h * w * 4 <= budget:
        return c, h
    # Prefer row-strip tiling (keeps the channel broadcast over full C).
    cap_rows = max(budget // (c * w * 4), 8)
    th = _largest_div_multiple_of(h, 8, cap_rows)
    if th is not None:
        return c, th
    # Rows not tileable (e.g. H has no multiple-of-8 divisor): tile channels.
    cap_ch = max(budget // (h * w * 4), 8)
    tc = _largest_div_multiple_of(c, 8, cap_ch)
    if tc is not None:
        return tc, h
    return c, h                                   # tiny/awkward shapes: full block


# --------------------------------------------------------------------------
# In-kernel fused grayscale mean + Sobel gradient magnitude for one row strip.
# x0_ref is the full-image (1, C0, H, W) VMEM block of the current batch elem.
# Returns a (th, W) float32 gradient-magnitude strip for image rows
# [strip_idx*th, strip_idx*th + th).
# --------------------------------------------------------------------------
def _gray_sobel_strip(x0_ref, strip_idx, th, num_strips):
    c0 = x0_ref.shape[1]
    h = x0_ref.shape[2]
    width = x0_ref.shape[3]
    inv_c0 = jnp.float32(1.0 / c0)

    if num_strips == 1:
        # Single strip: static full-extent load, zero row halos.
        g_mid = jnp.sum(x0_ref[0].astype(jnp.float32), axis=0) * inv_c0   # (H, W)
        g_top = jnp.zeros((1, width), jnp.float32)
        g_bot = jnp.zeros((1, width), jnp.float32)
    else:
        # th is a multiple of 8 here, so all dynamic row starts are 8-aligned.
        r0 = pl.multiple_of(strip_idx * th, 8)
        g_mid = jnp.sum(
            x0_ref[0, :, pl.ds(r0, th), :].astype(jnp.float32), axis=0) * inv_c0
        # 1-row halos fetched via aligned 8-row windows of the resident x0 block.
        pre_start = pl.multiple_of(jnp.maximum(r0 - 8, 0), 8)
        pre = jnp.sum(
            x0_ref[0, :, pl.ds(pre_start, 8), :].astype(jnp.float32),
            axis=0) * inv_c0
        g_top = jnp.where(strip_idx > 0, pre[7:8, :], 0.0)
        post_start = pl.multiple_of(jnp.minimum(r0 + th, h - 8), 8)
        post = jnp.sum(
            x0_ref[0, :, pl.ds(post_start, 8), :].astype(jnp.float32),
            axis=0) * inv_c0
        g_bot = jnp.where(strip_idx < num_strips - 1, post[0:1, :], 0.0)

    g_ext = jnp.concatenate([g_top, g_mid, g_bot], axis=0)          # (th+2, W)

    # Separable Sobel with zero column padding built in VMEM (no HBM pad).
    # TODO(synk): column neighbours could use pltpu.roll (XLU slot) instead of
    # lane-offset slices; kept as slices to exactly mirror the verified math.
    zcol = jnp.zeros((th + 2, 1), jnp.float32)
    g_pad = jnp.concatenate([zcol, g_ext, zcol], axis=1)            # (th+2, W+2)
    left = g_pad[:, 0:width]                                        # value at j-1
    right = g_pad[:, 2:width + 2]                                   # value at j+1

    smooth_h = left + 2.0 * g_ext + right                           # (th+2, W)
    diff_h = right - left                                           # (th+2, W)

    gx = diff_h[0:th, :] + 2.0 * diff_h[1:th + 1, :] + diff_h[2:th + 2, :]
    gy = smooth_h[2:th + 2, :] - smooth_h[0:th, :]
    return jnp.sqrt(gx * gx + gy * gy + 1e-8)                       # (th, W)


# --------------------------------------------------------------------------
# Fused attention kernel: (optional in-kernel Sobel) -> sigmoid(w*g+b) -> x*attn
# --------------------------------------------------------------------------
def _make_bea_kernel(th, num_strips, compute_sobel):
    def kernel(src_ref, x_ref, w_ref, b_ref, o_ref):
        s = pl.program_id(1)
        if compute_sobel:
            grad = _gray_sobel_strip(src_ref, s, th, num_strips)     # (th, W) f32
        else:
            grad = src_ref[0, 0].astype(jnp.float32)                 # (th, W)

        wv = w_ref[...].astype(jnp.float32)                          # (tc, 1)
        bv = b_ref[...].astype(jnp.float32)
        tc = wv.shape[0]
        attn = jax.nn.sigmoid(wv.reshape(tc, 1, 1) * grad[None, :, :]
                              + bv.reshape(tc, 1, 1))                # (tc, th, W)

        xv = x_ref[0]                                                # (tc, th, W)
        if xv.dtype == jnp.bfloat16:
            # Keep the multiply in the I/O dtype to halve vreg traffic.
            o_ref[0] = xv * attn.astype(jnp.bfloat16)
        else:
            o_ref[0] = (xv.astype(jnp.float32) * attn).astype(o_ref.dtype)
    return kernel


def _bea_apply(src, x, w, b, *, compute_sobel, block_bytes=None):
    """src is x0 (N,C0,H,W) when compute_sobel else a grad map (N,1,H,W)."""
    n, c, h, wd = x.shape
    cap = _vmem_capacity_bytes()
    budget = block_bytes if block_bytes is not None else _block_bytes_budget(cap)
    tc, th = _pick_tiles(c, h, wd, budget)
    num_strips = h // th
    num_ctiles = c // tc
    c0 = src.shape[1]

    if compute_sobel:
        # Full-image x0 block per batch element; its block index is constant
        # over (strip, channel-tile) so it is DMA'd once per batch element.
        src_spec = pl.BlockSpec((1, c0, h, wd), lambda i, s, t: (i, 0, 0, 0))
    else:
        src_spec = pl.BlockSpec((1, 1, th, wd), lambda i, s, t: (i, 0, s, 0))

    x_spec = pl.BlockSpec((1, tc, th, wd), lambda i, s, t: (i, t, s, 0))
    w_spec = pl.BlockSpec((tc, 1), lambda i, s, t: (t, 0))
    b_spec = pl.BlockSpec((tc, 1), lambda i, s, t: (t, 0))

    out = pl.pallas_call(
        _make_bea_kernel(th, num_strips, compute_sobel),
        out_shape=jax.ShapeDtypeStruct((n, c, h, wd), x.dtype),
        grid_spec=pltpu.PrefetchScalarGridSpec(
            num_scalar_prefetch=0,
            grid=(n, num_strips, num_ctiles),
            in_specs=[src_spec, x_spec, w_spec, b_spec],
            out_specs=x_spec,
        ),
        compiler_params=pltpu.CompilerParams(
            dimension_semantics=("parallel", "parallel", "parallel"),
            vmem_limit_bytes=_vmem_limit_bytes(cap)),
    )(src, x,
      w.reshape(c, 1).astype(jnp.float32),
      b.reshape(c, 1).astype(jnp.float32))
    return out


# --------------------------------------------------------------------------
# Standalone gray+Sobel kernel (only used when a bilinear resize is needed).
# --------------------------------------------------------------------------
def _make_sobel_kernel(th, num_strips):
    def kernel(x0_ref, o_ref):
        s = pl.program_id(1)
        o_ref[0] = _gray_sobel_strip(x0_ref, s, th, num_strips)
    return kernel


def _sobel_grad_map(x0, *, block_bytes=None):
    n, c0, h0, w0 = x0.shape
    cap = _vmem_capacity_bytes()
    budget = block_bytes if block_bytes is not None else _block_bytes_budget(cap)
    _, th = _pick_tiles(1, h0, w0, budget)
    num_strips = h0 // th
    # TODO(synk): the grad map could be stored as bf16 to halve its HBM round
    # trip on this (resize-only) path.
    return pl.pallas_call(
        _make_sobel_kernel(th, num_strips),
        out_shape=jax.ShapeDtypeStruct((n, h0, w0), jnp.float32),
        grid_spec=pltpu.PrefetchScalarGridSpec(
            num_scalar_prefetch=0,
            grid=(n, num_strips),
            in_specs=[pl.BlockSpec((1, c0, h0, w0), lambda i, s: (i, 0, 0, 0))],
            out_specs=pl.BlockSpec((1, th, w0), lambda i, s: (i, s, 0)),
        ),
        compiler_params=pltpu.CompilerParams(
            dimension_semantics=("parallel", "parallel"),
            vmem_limit_bytes=_vmem_limit_bytes(cap)),
    )(x0)


# --------------------------------------------------------------------------
# Public forward: matches MultiBoundaryAwareAttention.forward(x, x0).
# --------------------------------------------------------------------------
def multi_bea_forward(x, x0, w, b, *, block_bytes=None):
    """x: (N,C,H,W) features, x0: (N,C0,H0,W0) image, w/b: (C,) 1x1-conv params."""
    n, c, h, wd = x.shape
    if x0.shape[-2:] == (h, wd):
        # Common path: everything fused into a single kernel.
        return _bea_apply(x0, x, w, b, compute_sobel=True, block_bytes=block_bytes)

    grad = _sobel_grad_map(x0, block_bytes=block_bytes)
    # TODO(synk): bilinear resize (align_corners=False) is done with
    # jax.image.resize in the wrapper, not fused into the Pallas kernel.
    grad = jax.image.resize(grad, (n, h, wd), method="bilinear")
    return _bea_apply(grad.reshape(n, 1, h, wd), x, w, b,
                      compute_sobel=False, block_bytes=block_bytes)


# --------------------------------------------------------------------------
# Pure-JAX reference of the PyTorch forward (verification only).
# --------------------------------------------------------------------------
def _reference(x, x0, w, b):
    n, c, h, wd = x.shape
    x0f = x0.astype(jnp.float32)
    g = x0f if x0.shape[1] == 1 else jnp.mean(x0f, axis=1, keepdims=True)
    gh, gw = g.shape[2], g.shape[3]
    gp = jnp.pad(g, ((0, 0), (0, 0), (1, 1), (1, 1)))
    gx = jnp.zeros_like(g)
    gy = jnp.zeros_like(g)
    for i in range(3):
        for j in range(3):
            win = gp[:, :, i:i + gh, j:j + gw]
            gx = gx + _SOBEL_X[i][j] * win
            gy = gy + _SOBEL_Y[i][j] * win
    gmag = jnp.sqrt(gx * gx + gy * gy + 1e-8)
    if gmag.shape[-2:] != (h, wd):
        gmag = jax.image.resize(gmag, (n, 1, h, wd), method="bilinear")
    attn = jax.nn.sigmoid(w.reshape(1, c, 1, 1).astype(jnp.float32) * gmag
                          + b.reshape(1, c, 1, 1).astype(jnp.float32))
    return (x.astype(jnp.float32) * attn).astype(x.dtype)


if __name__ == "__main__":
    key = jax.random.PRNGKey(0)
    ks = jax.random.split(key, 8)

    # --- test 1: small shapes, single-block fused path ---------------------
    N, C, H, W = 2, 4, 16, 16
    x = jax.random.normal(ks[0], (N, C, H, W), dtype=jnp.float32)
    x0 = jax.random.normal(ks[1], (N, C, H, W), dtype=jnp.float32)
    w = jax.random.uniform(ks[2], (C,), jnp.float32, -1.0, 1.0)
    b = jax.random.uniform(ks[3], (C,), jnp.float32, -1.0, 1.0)

    out = jax.block_until_ready(multi_bea_forward(x, x0, w, b))
    np.testing.assert_allclose(np.asarray(out),
                               np.asarray(_reference(x, x0, w, b)),
                               rtol=1e-5, atol=5e-5)

    # --- test 2: force the row-strip (halo) path with a tiny byte budget ---
    N2, C2, H2, W2 = 1, 8, 64, 128
    x2 = jax.random.normal(ks[4], (N2, C2, H2, W2), dtype=jnp.float32)
    x02 = jax.random.normal(ks[5], (N2, 3, H2, W2), dtype=jnp.float32)
    w2 = jax.random.uniform(ks[6], (C2,), jnp.float32, -1.0, 1.0)
    b2 = jax.random.uniform(ks[7], (C2,), jnp.float32, -1.0, 1.0)

    out2 = jax.block_until_ready(
        multi_bea_forward(x2, x02, w2, b2, block_bytes=64 * 1024))
    np.testing.assert_allclose(np.asarray(out2),
                               np.asarray(_reference(x2, x02, w2, b2)),
                               rtol=1e-5, atol=5e-5)

    print("KERNEL_OK")
</pallas_src>

<mosaic_0001>
module attributes {stable_mosaic.version = 11 : i64} {
  func.func @kernel(%arg0: i32, %arg1: i32, %arg2: i32, %arg3: memref<1x4x16x16xf32, #tpu.memory_space<vmem>>, %arg4: memref<1x4x16x16xf32, #tpu.memory_space<vmem>>, %arg5: memref<4x1xf32, #tpu.memory_space<vmem>>, %arg6: memref<4x1xf32, #tpu.memory_space<vmem>>, %arg7: memref<1x4x16x16xf32, #tpu.memory_space<vmem>>) attributes {dimension_semantics = [#tpu.dimension_semantics<parallel>, #tpu.dimension_semantics<parallel>, #tpu.dimension_semantics<parallel>], iteration_bounds = array<i64: 2, 1, 1>, scalar_prefetch = 0 : i64, scratch_operands = 0 : i64, tpu.core_type = #tpu.core_type<tc>, window_params = [{transform_indices = @transform_0, window_bounds = array<i64: 1, 4, 16, 16>}, {transform_indices = @transform_1, window_bounds = array<i64: 1, 4, 16, 16>}, {transform_indices = @transform_2, window_bounds = array<i64: 4, 1>}, {transform_indices = @transform_3, window_bounds = array<i64: 4, 1>}, {transform_indices = @transform_4, window_bounds = array<i64: 1, 4, 16, 16>}]} {
    %c0 = arith.constant 0 : index
    %c0_0 = arith.constant 0 : index
    %c0_1 = arith.constant 0 : index
    %c0_2 = arith.constant 0 : index
    %0 = vector.load %arg3[%c0, %c0_0, %c0_1, %c0_2] : memref<1x4x16x16xf32, #tpu.memory_space<vmem>>, vector<1x4x16x16xf32>
    %1 = vector.shape_cast %0 : vector<1x4x16x16xf32> to vector<4x16x16xf32>
    %cst = arith.constant dense<0.000000e+00> : vector<16x16xf32>
    %2 = vector.multi_reduction <add>, %1, %cst [0] : vector<4x16x16xf32> to vector<16x16xf32>
    %cst_3 = arith.constant 2.500000e-01 : f32
    %3 = vector.broadcast %cst_3 : f32 to vector<16x16xf32>
    %4 = arith.mulf %2, %3 : vector<16x16xf32>
    %cst_4 = arith.constant 0.000000e+00 : f32
    %5 = vector.broadcast %cst_4 : f32 to vector<1x16xf32>
    %cst_5 = arith.constant 0.000000e+00 : f32
    %6 = vector.broadcast %cst_5 : f32 to vector<1x16xf32>
    %7 = tpu.concatenate %5, %4, %6 in 0 : vector<1x16xf32>, vector<16x16xf32>, vector<1x16xf32> -> vector<18x16xf32>
    %cst_6 = arith.constant 0.000000e+00 : f32
    %8 = vector.broadcast %cst_6 : f32 to vector<18x1xf32>
    %9 = tpu.concatenate %8, %7, %8 in 1 : vector<18x1xf32>, vector<18x16xf32>, vector<18x1xf32> -> vector<18x18xf32>
    %10 = vector.extract_strided_slice %9 {offsets = [0, 0], sizes = [18, 16], strides = [1, 1]} : vector<18x18xf32> to vector<18x16xf32>
    %11 = vector.extract_strided_slice %9 {offsets = [0, 2], sizes = [18, 16], strides = [1, 1]} : vector<18x18xf32> to vector<18x16xf32>
    %cst_7 = arith.constant 2.000000e+00 : f32
    %12 = vector.broadcast %cst_7 : f32 to vector<18x16xf32>
    %13 = arith.mulf %12, %7 : vector<18x16xf32>
    %14 = arith.addf %10, %13 : vector<18x16xf32>
    %15 = arith.addf %14, %11 : vector<18x16xf32>
    %16 = arith.subf %11, %10 : vector<18x16xf32>
    %17 = vector.extract_strided_slice %16 {offsets = [0, 0], sizes = [16, 16], strides = [1, 1]} : vector<18x16xf32> to vector<16x16xf32>
    %18 = vector.extract_strided_slice %16 {offsets = [1, 0], sizes = [16, 16], strides = [1, 1]} : vector<18x16xf32> to vector<16x16xf32>
    %cst_8 = arith.constant 2.000000e+00 : f32
    %19 = vector.broadcast %cst_8 : f32 to vector<16x16xf32>
    %20 = arith.mulf %19, %18 : vector<16x16xf32>
    %21 = arith.addf %17, %20 : vector<16x16xf32>
    %22 = vector.extract_strided_slice %16 {offsets = [2, 0], sizes = [16, 16], strides = [1, 1]} : vector<18x16xf32> to vector<16x16xf32>
    %23 = arith.addf %21, %22 : vector<16x16xf32>
    %24 = vector.extract_strided_slice %15 {offsets = [2, 0], sizes = [16, 16], strides = [1, 1]} : vector<18x16xf32> to vector<16x16xf32>
    %25 = vector.extract_strided_slice %15 {offsets = [0, 0], sizes = [16, 16], strides = [1, 1]} : vector<18x16xf32> to vector<16x16xf32>
    %26 = arith.subf %24, %25 : vector<16x16xf32>
    %27 = arith.mulf %23, %23 : vector<16x16xf32>
    %28 = arith.mulf %26, %26 : vector<16x16xf32>
    %29 = arith.addf %27, %28 : vector<16x16xf32>
    %cst_9 = arith.constant 9.99999993E-9 : f32
    %30 = vector.broadcast %cst_9 : f32 to vector<16x16xf32>
    %31 = arith.addf %29, %30 : vector<16x16xf32>
    %32 = math.sqrt %31 : vector<16x16xf32>
    %c0_10 = arith.constant 0 : index
    %c0_11 = arith.constant 0 : index
    %33 = vector.load %arg5[%c0_10, %c0_11] : memref<4x1xf32, #tpu.memory_space<vmem>>, vector<4x1xf32>
    %c0_12 = arith.constant 0 : index
    %c0_13 = arith.constant 0 : index
    %34 = vector.load %arg6[%c0_12, %c0_13] : memref<4x1xf32, #tpu.memory_space<vmem>>, vector<4x1xf32>
    %35 = vector.shape_cast %33 : vector<4x1xf32> to vector<4x1x1xf32>
    %36 = vector.shape_cast %32 : vector<16x16xf32> to vector<1x16x16xf32>
    %37 = vector.broadcast %35 : vector<4x1x1xf32> to vector<4x16x16xf32>
    %38 = vector.broadcast %36 : vector<1x16x16xf32> to vector<4x16x16xf32>
    %39 = arith.mulf %37, %38 : vector<4x16x16xf32>
    %40 = vector.shape_cast %34 : vector<4x1xf32> to vector<4x1x1xf32>
    %41 = vector.broadcast %40 : vector<4x1x1xf32> to vector<4x16x16xf32>
    %42 = arith.addf %39, %41 : vector<4x16x16xf32>
    %43 = arith.negf %42 : vector<4x16x16xf32>
    %44 = math.exp %43 : vector<4x16x16xf32>
    %cst_14 = arith.constant 1.000000e+00 : f32
    %45 = vector.broadcast %cst_14 : f32 to vector<4x16x16xf32>
    %46 = arith.addf %45, %44 : vector<4x16x16xf32>
    %47 = arith.divf %45, %46 : vector<4x16x16xf32>
    %c0_15 = arith.constant 0 : index
    %c0_16 = arith.constant 0 : index
    %c0_17 = arith.constant 0 : index
    %c0_18 = arith.constant 0 : index
    %48 = vector.load %arg4[%c0_15, %c0_16, %c0_17, %c0_18] : memref<1x4x16x16xf32, #tpu.memory_space<vmem>>, vector<1x4x16x16xf32>
    %49 = vector.shape_cast %48 : vector<1x4x16x16xf32> to vector<4x16x16xf32>
    %50 = arith.mulf %49, %47 : vector<4x16x16xf32>
    %c0_19 = arith.constant 0 : index
    %c0_20 = arith.constant 0 : index
    %c0_21 = arith.constant 0 : index
    %c0_22 = arith.constant 0 : index
    %51 = vector.load %arg7[%c0_19, %c0_20, %c0_21, %c0_22] : memref<1x4x16x16xf32, #tpu.memory_space<vmem>>, vector<1x4x16x16xf32>
    %52 = vector.shape_cast %51 : vector<1x4x16x16xf32> to vector<4x16x16xf32>
    %53 = vector.shape_cast %50 : vector<4x16x16xf32> to vector<1x4x16x16xf32>
    tpu.vector_store %arg7[%c0_19, %c0_20, %c0_21, %c0_22], %53 {strides = array<i32>} : memref<1x4x16x16xf32, #tpu.memory_space<vmem>>, vector<1x4x16x16xf32>,
    return
  }
  func.func @transform_0(%arg0: i32, %arg1: i32, %arg2: i32) -> (i32, i32, i32, i32) {
    %c0_i32 = arith.constant 0 : i32
    %c0_i32_0 = arith.constant 0 : i32
    %c0_i32_1 = arith.constant 0 : i32
    %c0_i32_2 = arith.constant 0 : i32
    return %arg0, %c0_i32, %c0_i32_0, %c0_i32_1 : i32, i32, i32, i32
  }
  func.func @transform_1(%arg0: i32, %arg1: i32, %arg2: i32) -> (i32, i32, i32, i32) {
    %c0_i32 = arith.constant 0 : i32
    %c0_i32_0 = arith.constant 0 : i32
    return %arg0, %arg2, %arg1, %c0_i32 : i32, i32, i32, i32
  }
  func.func @transform_2(%arg0: i32, %arg1: i32, %arg2: i32) -> (i32, i32) {
    %c0_i32 = arith.constant 0 : i32
    %c0_i32_0 = arith.constant 0 : i32
    return %arg2, %c0_i32 : i32, i32
  }
  func.func @transform_3(%arg0: i32, %arg1: i32, %arg2: i32) -> (i32, i32) {
    %c0_i32 = arith.constant 0 : i32
    %c0_i32_0 = arith.constant 0 : i32
    return %arg2, %c0_i32 : i32, i32
  }
  func.func @transform_4(%arg0: i32, %arg1: i32, %arg2: i32) -> (i32, i32, i32, i32) {
    %c0_i32 = arith.constant 0 : i32
    %c0_i32_0 = arith.constant 0 : i32
    return %arg0, %arg2, %arg1, %c0_i32 : i32, i32, i32, i32
  }
}

</mosaic_0001>

<llo_original>
// kernel: tpu_custom_call.1
$region0: #{tpu_custom_call.1}
  #allocation0 [shape = 'u32[]', space=smem, size = 0x4, offset = 0x4, fixed_abs, tag = 'smem constant byte address 0x4 - core index']
  #allocation1 [shape = 'u32[144,128]{1,0:T(1,128)}', space=vmem, size = 0x12000, scoped, tag = 'internal scratch']
  %s0 = inlined_call_operand.hbm [shape: f32[2,4,16,16], index: 0, kind: input, shape index: {}]
  %s1 = inlined_call_operand.hbm [shape: f32[2,4,16,16], index: 1, kind: input, shape index: {}]
  %s2 = inlined_call_operand.vmem [shape: f32[4,1], index: 2, kind: input, shape index: {}]
  %s3 = inlined_call_operand.vmem [shape: f32[4,1], index: 3, kind: input, shape index: {}]
  %s4 = inlined_call_operand.hbm [shape: f32[2,4,16,16], index: 4, kind: output, shape index: {}]
  %s5 = sld [smem:[#allocation0]]
  $region57: #{tpu_custom_call.1} parent=0
    _
  %s7 = ssub.s32 1, %s5
  %s8 = scalar_select 0, %s7, %s5
  $region1: #{tpu_custom_call.1} parent=0
    #allocation2 [shape = 'u8[65536]{0}', space=vmem, size = 0x10000, scoped, tag = 'input window, operand 0']
    #allocation3 [shape = 's32[2]{0}', space=sflag, size = 0x8, scoped, tag = 'scoped memory for tpu_custom_call.1']
    #allocation4 [shape = 's32[2]{0}', space=sflag, size = 0x8, scoped, tag = 'scoped memory for tpu_custom_call.1']
    #allocation5 [shape = 'u8[65536]{0}', space=vmem, size = 0x10000, scoped, tag = 'input window, operand 1']
    #allocation6 [shape = 's32[2]{0}', space=sflag, size = 0x8, scoped, tag = 'scoped memory for tpu_custom_call.1']
    #allocation7 [shape = 'u8[65536]{0}', space=vmem, size = 0x10000, scoped, tag = 'output window, operand 0']
    %9 = vsyncpa [#allocation3], 0
    %s10 = scalar_lea.sflag [#allocation3], 1
    %11 = vsyncpa %s10, 0
    %12 = vsyncpa [#allocation6], 0
    %s13 = scalar_lea.sflag [#allocation6], 1
    %14 = vsyncpa %s13, 0
    %15 = vsyncpa [#allocation4], 0
    %s16 = scalar_lea.sflag [#allocation4], 1
    %17 = vsyncpa %s16, 0
    loop: start=0, step=1, limit=4
    $region2: #{tpu_custom_call.1} parent=1 // loop_pre_header
      _
    $region3: #{tpu_custom_call.1} parent=1 // loop_header
      %s19 = sphi 0, %s23
      %p20 = scmp.ge.s32.totalorder %s19, 4
      %s26 = sphi 0, %s45
      %s27 = sphi 0, %s41
      %s28 = sphi 0, %s37
      %s29 = sphi 0, %s26
      %s30 = sphi 0, %s27
      %s31 = sphi 0, %s28
      %s32 = sphi 0, %s29
      %s33 = sphi 0, %s30
      %s34 = sphi 0, %s31
      %s48 = sphi 0, %s50
      %s51 = sphi 0, %s48
      %s52 = sphi 0, %s51
      %s68 = sphi 0, %s52
      %s78 = sphi 0, %s80
      %s81 = sphi 0, %s78
      %s82 = sphi 0, %s81
      %s98 = sphi 0, %s82
      %s104 = sphi 0, %s106
      %s107 = sphi 0, %s104
      %s108 = sphi 0, %s107
      %s124 = sphi 0, %s108
      %s130 = sphi 0, %s132
      %s133 = sphi 0, %s130
      %s134 = sphi 0, %s133
      %s150 = sphi 0, %s134
      %s160 = sphi 0, %s162
      %s163 = sphi 0, %s160
      %s164 = sphi 0, %s163
      %s180 = sphi 0, %s164
    $region4: #{tpu_custom_call.1} parent=1 // loop_header_branch
      %22 = sbr.rel (%p20) target = $region8
    $region5: #{tpu_custom_call.1} parent=1 // loop_body
      %s24 = ssub.s32 %s19, 1
      %s25 = ssub.s32 %s19, 2
      %s35 = sadd.s32 1, %s28
      %p36 = scmp.ge.s32.totalorder %s35, 1
      %s37 = scalar_select %p36, 0, %s35
      %s38 = sadd.s32 1, %s27
      %s39 = scalar_select %p36, %s38, %s27
      %p40 = scmp.ge.s32.totalorder %s39, 1
      %s41 = scalar_select %p40, 0, %s39
      %s42 = sadd.s32 1, %s26
      %s43 = scalar_select %p40, %s42, %s26
      %p44 = scmp.ge.s32.totalorder %s43, 2
      %s45 = scalar_select %p44, 0, %s43
      %s46 = ssub.s32 %s26, %s45
      %p47 = scmp.eq.s32.totalorder %s46, 0
      %s49 = sadd.s32 %s48, 1
      %s50 = scalar_select %p47, %s48, %s49
      %p53 = pneg %p47
      %p54 = scmp.eq.s32.totalorder %s19, 1
      %p55 = por %p53, %p54
      %p56 = scmp.ne.s32.totalorder %s48, %s51
      %p57 = scmp.eq.s32.totalorder %s19, 0
      %p58 = por %p56, %p57
      %p59 = scmp.ne.s32.totalorder %s48, %s51
      %p60 = scmp.eq.s32.totalorder %s24, 1
      %p61 = por %p59, %p60
      %p62 = scmp.ne.s32.totalorder %s51, %s52
      %p63 = scmp.eq.s32.totalorder %s24, 0
      %p64 = por %p62, %p63
      %p65 = scmp.ne.s32.totalorder %s51, %s52
      %p66 = scmp.eq.s32.totalorder %s25, 1
      %p67 = por %p65, %p66
      %p69 = scmp.ne.s32.totalorder %s52, %s68
      %p70 = scmp.eq.s32.totalorder %s25, 0
      %p71 = por %p69, %p70
      %s72 = ssub.s32 %s26, %s45
      %s73 = ssub.s32 %s28, %s37
      %s74 = sor.u32 %s72, %s73
      %s75 = ssub.s32 %s27, %s41
      %s76 = sor.u32 %s74, %s75
      %p77 = scmp.eq.s32.totalorder %s76, 0
      %s79 = sadd.s32 %s78, 1
      %s80 = scalar_select %p77, %s78, %s79
      %p83 = pneg %p77
      %p84 = scmp.eq.s32.totalorder %s19, 1
      %p85 = por %p83, %p84
      %p86 = scmp.ne.s32.totalorder %s78, %s81
      %p87 = scmp.eq.s32.totalorder %s19, 0
      %p88 = por %p86, %p87
      %p89 = scmp.ne.s32.totalorder %s78, %s81
      %p90 = scmp.eq.s32.totalorder %s24, 1
      %p91 = por %p89, %p90
      %p92 = scmp.ne.s32.totalorder %s81, %s82
      %p93 = scmp.eq.s32.totalorder %s24, 0
      %p94 = por %p92, %p93
      %p95 = scmp.ne.s32.totalorder %s81, %s82
      %p96 = scmp.eq.s32.totalorder %s25, 1
      %p97 = por %p95, %p96
      %p99 = scmp.ne.s32.totalorder %s82, %s98
      %p100 = scmp.eq.s32.totalorder %s25, 0
      %p101 = por %p99, %p100
      %s102 = ssub.s32 %s28, %s37
      %p103 = scmp.eq.s32.totalorder %s102, 0
      %s105 = sadd.s32 %s104, 1
      %s106 = scalar_select %p103, %s104, %s105
      %p109 = pneg %p103
      %p110 = scmp.eq.s32.totalorder %s19, 1
      %p111 = por %p109, %p110
      %p112 = scmp.ne.s32.totalorder %s104, %s107
      %p113 = scmp.eq.s32.totalorder %s19, 0
      %p114 = por %p112, %p113
      %p115 = scmp.ne.s32.totalorder %s104, %s107
      %p116 = scmp.eq.s32.totalorder %s24, 1
      %p117 = por %p115, %p116
      %p118 = scmp.ne.s32.totalorder %s107, %s108
      %p119 = scmp.eq.s32.totalorder %s24, 0
      %p120 = por %p118, %p119
      %p121 = scmp.ne.s32.totalorder %s107, %s108
      %p122 = scmp.eq.s32.totalorder %s25, 1
      %p123 = por %p121, %p122
      %p125 = scmp.ne.s32.totalorder %s108, %s124
      %p126 = scmp.eq.s32.totalorder %s25, 0
      %p127 = por %p125, %p126
      %s128 = ssub.s32 %s28, %s37
      %p129 = scmp.eq.s32.totalorder %s128, 0
      %s131 = sadd.s32 %s130, 1
      %s132 = scalar_select %p129, %s130, %s131
      %p135 = pneg %p129
      %p136 = scmp.eq.s32.totalorder %s19, 1
      %p137 = por %p135, %p136
      %p138 = scmp.ne.s32.totalorder %s130, %s133
      %p139 = scmp.eq.s32.totalorder %s19, 0
      %p140 = por %p138, %p139
      %p141 = scmp.ne.s32.totalorder %s130, %s133
      %p142 = scmp.eq.s32.totalorder %s24, 1
      %p143 = por %p141, %p142
      %p144 = scmp.ne.s32.totalorder %s133, %s134
      %p145 = scmp.eq.s32.totalorder %s24, 0
      %p146 = por %p144, %p145
      %p147 = scmp.ne.s32.totalorder %s133, %s134
      %p148 = scmp.eq.s32.totalorder %s25, 1
      %p149 = por %p147, %p148
      %p151 = scmp.ne.s32.totalorder %s134, %s150
      %p152 = scmp.eq.s32.totalorder %s25, 0
      %p153 = por %p151, %p152
      %s154 = ssub.s32 %s26, %s45
      %s155 = ssub.s32 %s28, %s37
      %s156 = sor.u32 %s154, %s155
      %s157 = ssub.s32 %s27, %s41
      %s158 = sor.u32 %s156, %s157
      %p159 = scmp.eq.s32.totalorder %s158, 0
      %s161 = sadd.s32 %s160, 1
      %s162 = scalar_select %p159, %s160, %s161
      %p165 = pneg %p159
      %p166 = scmp.eq.s32.totalorder %s19, 1
      %p167 = por %p165, %p166
      %p168 = scmp.ne.s32.totalorder %s160, %s163
      %p169 = scmp.eq.s32.totalorder %s19, 0
      %p170 = por %p168, %p169
      %p171 = scmp.ne.s32.totalorder %s160, %s163
      %p172 = scmp.eq.s32.totalorder %s24, 1
      %p173 = por %p171, %p172
      %p174 = scmp.ne.s32.totalorder %s163, %s164
      %p175 = scmp.eq.s32.totalorder %s24, 0
      %p176 = por %p174, %p175
      %p177 = scmp.ne.s32.totalorder %s163, %s164
      %p178 = scmp.eq.s32.totalorder %s25, 1
      %p179 = por %p177, %p178
      %p181 = scmp.ne.s32.totalorder %s164, %s180
      %p182 = scmp.eq.s32.totalorder %s25, 0
      %p183 = por %p181, %p182
      %p184 = scmp.le.s32.totalorder 1, %s19
      %p185 = scmp.lt.s32.totalorder %s19, 3
      %p186 = pnand %p184, %p185
      %p187 = pneg %p186
      // Predicated region
      $region9: #{tpu_custom_call.1} parent=5 // pred_check
        _
      $region10: #{tpu_custom_call.1} parent=5 // pred_check_branch
        %189 = sbr.rel (%p186) target = $region12
      $region11: #{tpu_custom_call.1} parent=5 // pred_region
        %s190 = ssub.s32 %s19, 1
        // Predicated region
        $region13: #{tpu_custom_call.1} parent=11 // pred_check
          %p191 = pneg %p120
        $region14: #{tpu_custom_call.1} parent=11 // pred_check_branch
          %193 = sbr.rel (%p191) target = $region16
        $region15: #{tpu_custom_call.1} parent=11 // pred_region
          %p194 = scmp.lt.s32.totalorder %s31, 0
          %s195 = scalar_select %p194, %s31, 0
          %s196 = smul.addr %s195, 4
          %s197 = scalar_lea.vmem %s2, %s196
        $region16: #{tpu_custom_call.1} parent=11 // pred_fallthru
          _
        // Predicated region
        $region17: #{tpu_custom_call.1} parent=11 // pred_check
          %p198 = pneg %p146
        $region18: #{tpu_custom_call.1} parent=11 // pred_check_branch
          %200 = sbr.rel (%p198) target = $region20
        $region19: #{tpu_custom_call.1} parent=11 // pred_region
          %p201 = scmp.lt.s32.totalorder %s31, 0
          %s202 = scalar_select %p201, %s31, 0
          %s203 = smul.addr %s202, 4
          %s204 = scalar_lea.vmem %s3, %s203
        $region20: #{tpu_custom_call.1} parent=11 // pred_fallthru
          _
      $region12: #{tpu_custom_call.1} parent=5 // pred_fallthru
        _
      %p205 = scmp.lt.s32.totalorder %s19, 2
      // Predicated region
      $region21: #{tpu_custom_call.1} parent=5 // pred_check
        %p206 = pneg %p205
      $region22: #{tpu_custom_call.1} parent=5 // pred_check_branch
        %208 = sbr.rel (%p206) target = $region24
      $region23: #{tpu_custom_call.1} parent=5 // pred_region
        // Predicated region
        $region25: #{tpu_custom_call.1} parent=23 // pred_check
          %p209 = pneg %p58
        $region26: #{tpu_custom_call.1} parent=23 // pred_check_branch
          %211 = sbr.rel (%p209) target = $region28
        $region27: #{tpu_custom_call.1} parent=23 // pred_region
          %s212 = sand.u32 %s48, 1
          %s213 = scalar_lea.sflag [#allocation3], %s212
          %s214 = sand.u32 %s48, 1
          %s215 = smul.addr %s214, 64
          %s216 = scalar_lea.vmem [#allocation2], %s215
          %s218 = ssub.s32 1024, 1024
          %219 = vsyncadd %s213, %s218
          %s220 = smul.addr %s26, 8
          %s221 = smul.addr %s220, 128
          %s222 = scalar_lea.hbm %s0, %s221
          %s223 = sshll.u32 %s216, 4
          %s224 = int_to_ptr.vmem [resolvable:$true] %s223
          %229 = dma.hbm_to_vmem [thread:$0]  %s222, 1024, %s224, %s213, 128, 128, 8
        $region28: #{tpu_custom_call.1} parent=23 // pred_fallthru
          _
        // Predicated region
        $region29: #{tpu_custom_call.1} parent=23 // pred_check
          %p230 = pneg %p88
        $region30: #{tpu_custom_call.1} parent=23 // pred_check_branch
          %232 = sbr.rel (%p230) target = $region32
        $region31: #{tpu_custom_call.1} parent=23 // pred_region
          %s233 = sand.u32 %s78, 1
          %s234 = scalar_lea.sflag [#allocation6], %s233
          %s235 = sand.u32 %s78, 1
          %s236 = smul.addr %s235, 64
          %s237 = scalar_lea.vmem [#allocation5], %s236
          %s238 = smul.u32 4, %s28
          %s239 = smul.u32 2, %s27
          %s241 = ssub.s32 1024, 1024
          %242 = vsyncadd %s234, %s241
          %s243 = smul.addr %s238, 2
          %s244 = sadd.s32 %s239, %s243
          %s245 = smul.addr %s26, 8
          %s246 = sadd.s32 %s244, %s245
          %s247 = smul.addr %s246, 128
          %s248 = scalar_lea.hbm %s1, %s247
          %s249 = sshll.u32 %s237, 4
          %s250 = int_to_ptr.vmem [resolvable:$true] %s249
          %255 = dma.hbm_to_vmem [thread:$0]  %s248, 1024, %s250, %s234, 128, 128, 8
        $region32: #{tpu_custom_call.1} parent=23 // pred_fallthru
          _
      $region24: #{tpu_custom_call.1} parent=5 // pred_fallthru
        _
      %p256 = scmp.le.s32.totalorder 1, %s19
      %p257 = scmp.lt.s32.totalorder %s19, 3
      %p258 = pnand %p256, %p257
      %p259 = pneg %p258
      // Predicated region
      $region33: #{tpu_custom_call.1} parent=5 // pred_check
        _
      $region34: #{tpu_custom_call.1} parent=5 // pred_check_branch
        %261 = sbr.rel (%p258) target = $region36
      $region35: #{tpu_custom_call.1} parent=5 // pred_region
        %s262 = ssub.s32 %s19, 1
        %s263 = sand.u32 %s51, 1
        %s264 = scalar_lea.sflag [#allocation3], %s263
        %s265 = sand.u32 %s51, 1
        %s266 = smul.addr %s265, 64
        %s267 = scalar_lea.vmem [#allocation2], %s266
        // Predicated region
        $region37: #{tpu_custom_call.1} parent=35 // pred_check
          %p268 = pneg %p64
        $region38: #{tpu_custom_call.1} parent=35 // pred_check_branch
          %270 = sbr.rel (%p268) target = $region40
        $region39: #{tpu_custom_call.1} parent=35 // pred_region
          %271 = dma.done %s264, 1024
        $region40: #{tpu_custom_call.1} parent=35 // pred_fallthru
          _
        %s272 = sand.u32 %s81, 1
        %s273 = scalar_lea.sflag [#allocation6], %s272
        %s274 = sand.u32 %s81, 1
        %s275 = smul.addr %s274, 64
        %s276 = scalar_lea.vmem [#allocation5], %s275
        // Predicated region
        $region41: #{tpu_custom_call.1} parent=35 // pred_check
          %p277 = pneg %p94
        $region42: #{tpu_custom_call.1} parent=35 // pred_check_branch
          %279 = sbr.rel (%p277) target = $region44
        $region43: #{tpu_custom_call.1} parent=35 // pred_region
          %280 = dma.done %s273, 1024
        $region44: #{tpu_custom_call.1} parent=35 // pred_fallthru
          _
        %s281 = sand.u32 %s51, 1
        %s282 = scalar_lea.sflag [#allocation3], %s281
        %s283 = sand.u32 %s51, 1
        %s284 = smul.addr %s283, 64
        %s285 = scalar_lea.vmem [#allocation2], %s284
        %p286 = pneg %p64
        %p287 = pneg %p61
        %s288 = sand.u32 %s81, 1
        %s289 = scalar_lea.sflag [#allocation6], %s288
        %s290 = sand.u32 %s81, 1
        %s291 = smul.addr %s290, 64
        %s292 = scalar_lea.vmem [#allocation5], %s291
        %p293 = pneg %p94
        %p294 = pneg %p91
        %p295 = scmp.lt.s32.totalorder %s31, 0
        %s296 = scalar_select %p295, %s31, 0
        %s297 = smul.addr %s296, 4
        %s298 = scalar_lea.vmem %s2, %s297
        %p299 = pneg %p120
        %p300 = pneg %p117
        %p301 = scmp.lt.s32.totalorder %s31, 0
        %s302 = scalar_select %p301, %s31, 0
        %s303 = smul.addr %s302, 4
        %s304 = scalar_lea.vmem %s3, %s303
        %p305 = pneg %p146
        %p306 = pneg %p143
        %p307 = pneg %p176
        %p308 = pneg %p173
        %s309 = sand.u32 %s163, 1
        %s310 = scalar_lea.sflag [#allocation4], %s309
        %s311 = sand.u32 %s163, 1
        %s312 = smul.addr %s311, 64
        %s313 = scalar_lea.vmem [#allocation7], %s312
        %s314 = smul.u32 4, %s31
        %s315 = smul.u32 2, %s30
        %p316 = scmp.lt.s32.totalorder %s31, 0
        %s317 = scalar_select %p316, %s31, 0
        %s318 = smul.addr %s317, 4
        %s319 = scalar_lea.vmem %s2, %s318
        %p320 = scmp.lt.s32.totalorder %s31, 0
        %s321 = scalar_select %p320, %s31, 0
        %s322 = smul.addr %s321, 4
        %s323 = scalar_lea.vmem %s3, %s322
        %s324 = smul.u32 4, %s31
        %s325 = smul.u32 2, %s30
        %v326 = vld [vmem:[%s267] sm:$0xff]
        %v327 = vld [vmem:[%s267 + $0x8] sm:$0xff]
        %v328 = vld [vmem:[%s267 + $0x10] sm:$0xff]
        %v329 = vld [vmem:[%s267 + $0x18] sm:$0xff]
        %v330 = vld [vmem:[%s267 + $0x20] sm:$0xff]
        %v331 = vld [vmem:[%s267 + $0x28] sm:$0xff]
        %v332 = vld [vmem:[%s267 + $0x30] sm:$0xff]
        %v333 = vld [vmem:[%s267 + $0x38] sm:$0xff]
        %vm334 = vcmask 130048
        %v335 = vsel %vm334, %v326, 0.0
        %v336 = vsel %vm334, %v328, 0.0
        %v337 = vadd.f32 %v335, %v336
        %v338 = vsel %vm334, %v330, 0.0
        %v339 = vadd.f32 %v337, %v338
        %v340 = vsel %vm334, %v332, 0.0
        %v341 = vadd.f32 %v339, %v340
        %v342 = vsel %vm334, %v327, 0.0
        %v343 = vsel %vm334, %v329, 0.0
        %v344 = vadd.f32 %v342, %v343
        %v345 = vsel %vm334, %v331, 0.0
        %v346 = vadd.f32 %v344, %v345
        %v347 = vsel %vm334, %v333, 0.0
        %v348 = vadd.f32 %v346, %v347
        %v349 = vmul.f32 %v341, 0.25
        %v350 = vmul.f32 %v348, 0.25
        %vm353 = vcmask 1040384
        %v354 = vrot.slane %v349, 7
        %v355 = vrot.slane %v350, 7
        %v356 = vsel %vm353, %v354, %v355
        %v360 = vsel %vm353, 0.0, %v354
        %v361 = vsel %vm353, %v355, 0.0
        %364 = vrot.lane.b32.xlu0 %v360, 1
        %v365 = vpop.permute.xlu0 %364
        %366 = vrot.lane.b32.xlu0 %v356, 1
        %v367 = vpop.permute.xlu0 %366
        %368 = vrot.lane.b32.xlu0 %v361, 1
        %v369 = vpop.permute.xlu0 %368
        %vm373 = vcmask 7168
        %v374 = vsel %vm373, 0.0, %v365
        %v375 = vsel %vm373, 0.0, %v367
        %v376 = vsel %vm373, 0.0, %v369
        %vm377 = vcmask 138240
        %v378 = vsel %vm377, %v374, 0.0
        %v379 = vsel %vm377, %v375, 0.0
        %v380 = vsel %vm377, %v376, 0.0
        %v381 = vmul.f32 %v360, 2.0
        %v382 = vmul.f32 %v356, 2.0
        %v383 = vmul.f32 %v361, 2.0
        %v384 = vadd.f32 %v378, %v381
        %v385 = vadd.f32 %v379, %v382
        %v386 = vadd.f32 %v380, %v383
        %390 = vrot.lane.b32.xlu0 %v378, 126
        %v391 = vpop.permute.xlu0 %390
        %392 = vrot.lane.b32.xlu0 %v379, 126
        %v393 = vpop.permute.xlu0 %392
        %394 = vrot.lane.b32.xlu0 %v380, 126
        %v395 = vpop.permute.xlu0 %394
        %v399 = vadd.f32 %v384, %v391
        %v400 = vadd.f32 %v385, %v393
        %v401 = vadd.f32 %v386, %v395
        %402 = vrot.lane.b32.xlu0 %v378, 2
        %v403 = vpop.permute.xlu0 %402
        %404 = vrot.lane.b32.xlu0 %v379, 2
        %v405 = vpop.permute.xlu0 %404
        %406 = vrot.lane.b32.xlu0 %v380, 2
        %v407 = vpop.permute.xlu0 %406
        %v411 = vsub.f32 %v378, %v403
        %v412 = vsub.f32 %v379, %v405
        %v413 = vsub.f32 %v380, %v407
        %v414 = vmul.f32 %v411, 2.0
        %v415 = vmul.f32 %v412, 2.0
        %v416 = vmul.f32 %v413, 2.0
        %vm420 = vcmask 1046528
        %v421 = vrot.slane %v414, 1
        %v422 = vrot.slane %v415, 1
        %v423 = vsel %vm420, %v421, %v422
        %v424 = vrot.slane %v416, 1
        %v425 = vsel %vm420, %v422, %v424
        %v428 = vadd.f32 %v411, %v423
        %v429 = vadd.f32 %v412, %v425
        %vm433 = vcmask 1045504
        %v434 = vrot.slane %v411, 2
        %v435 = vrot.slane %v412, 2
        %v436 = vsel %vm433, %v434, %v435
        %v437 = vrot.slane %v413, 2
        %v438 = vsel %vm433, %v435, %v437
        %v441 = vadd.f32 %v428, %v436
        %v442 = vadd.f32 %v429, %v438
        %vm445 = vcmask 1041408
        %v446 = vrot.slane %v399, 6
        %v447 = vrot.slane %v400, 6
        %v448 = vsel %vm445, %v446, %v447
        %v452 = vsub.f32 %v399, %v446
        %v453 = vsub.f32 %v400, %v448
        %v454 = vsub.f32 %v401, %v447
        %v455 = vmul.f32 %v441, %v441
        %v456 = vmul.f32 %v442, %v442
        %v457 = vmul.f32 %v452, %v452
        %v458 = vmul.f32 %v453, %v453
        %v459 = vmul.f32 %v454, %v454
        %v463 = vrot.slane %v457, 2
        %v464 = vrot.slane %v458, 2
        %v465 = vsel %vm433, %v463, %v464
        %v466 = vrot.slane %v459, 2
        %v467 = vsel %vm433, %v464, %v466
        %468 = vrot.lane.b32.xlu0 %v465, 2
        %v469 = vpop.permute.xlu0 %468
        %470 = vrot.lane.b32.xlu0 %v467, 2
        %v471 = vpop.permute.xlu0 %470
        %v474 = vadd.f32 %v455, %v469
        %v475 = vadd.f32 %v456, %v471
        %v476 = vadd.f32 %v474, 1e-08
        %v477 = vadd.f32 %v475, 1e-08
        %v478 = vrsqrt.pop %v476
        %v479 = vmul.f32 %v476, %v478
        %vm480 = vcmp.eq.f32.partialorder %v476, inf
        %v481 = vsel %vm480, %v476, %v479
        %vm482 = vcmp.eq.f32.partialorder %v476, 0.0
        %v483 = vand.u32 %v476, 2147483648
        %v484 = vsel %vm482, %v483, %v481
        %v485 = vrsqrt.pop %v477
        %v486 = vmul.f32 %v477, %v485
        %vm487 = vcmp.eq.f32.partialorder %v477, inf
        %v488 = vsel %vm487, %v477, %v486
        %vm489 = vcmp.eq.f32.partialorder %v477, 0.0
        %v490 = vand.u32 %v477, 2147483648
        %v491 = vsel %vm489, %v490, %v488
        %v492 = vld [vmem:[%s319] sm:$0xf]
        %v493 = vld [vmem:[%s323] sm:$0xf]
        %v496 = vunpack.c.l.s4 1966171168
        %v497 = vunpack.c.0.s8 %v496
        %v498 = vlaneseq
        %v499 = vshrl.u32 %v498, 7
        %v500 = vsub.s32 %v497, %v499
        %v501 = vrot.slane %v492, %v500
        %v502 = vcombine.high %v501, %v501
        %v504 = vunpack.c.l.s4 1966171168
        %v505 = vunpack.c.0.s8 %v504
        %v506 = vlaneseq
        %v507 = vshrl.u32 %v506, 7
        %v508 = vsub.s32 %v505, %v507
        %v509 = vrot.slane %v501, %v508
        %v511 = vunpack.c.l.s4 1966171168
        %v512 = vunpack.c.0.s8 %v511
        %v513 = vlaneseq
        %v514 = vshrl.u32 %v513, 7
        %v515 = vsub.s32 %v512, %v514
        %v516 = vrot.slane %v502, %v515
        %v517 = vcombine.high %v509, %v509
        %v518 = vcombine.high %v516, %v516
        %v519 = vlaneseq
        %v520 = vshrl.u32 %v519, 7
        %v521 = vsub.s32 0, %v520
        %v522 = vrot.slane %v509, %v521
        %v523 = vlaneseq
        %v524 = vshrl.u32 %v523, 7
        %v525 = vsub.s32 0, %v524
        %v526 = vrot.slane %v516, %v525
        %v527 = vlaneseq
        %v528 = vshrl.u32 %v527, 7
        %v529 = vsub.s32 0, %v528
        %v530 = vrot.slane %v517, %v529
        %v531 = vlaneseq
        %v532 = vshrl.u32 %v531, 7
        %v533 = vsub.s32 0, %v532
        %v534 = vrot.slane %v518, %v533
        %535 = vset.pattern.permute.xlu0 0
        %536 = vperm.xlu0 %535, %v522
        %v537 = vpop.permute.xlu0 %536
        %539 = vset.pattern.permute.xlu0 0
        %540 = vperm.xlu0 %539, %v526
        %v541 = vpop.permute.xlu0 %540
        %543 = vset.pattern.permute.xlu0 0
        %544 = vperm.xlu0 %543, %v530
        %v545 = vpop.permute.xlu0 %544
        %547 = vset.pattern.permute.xlu0 0
        %548 = vperm.xlu0 %547, %v534
        %v549 = vpop.permute.xlu0 %548
        %v551 = vmul.f32 %v537, %v484
        %v552 = vmul.f32 %v537, %v491
        %v553 = vmul.f32 %v541, %v484
        %v554 = vmul.f32 %v541, %v491
        %v555 = vmul.f32 %v545, %v484
        %v556 = vmul.f32 %v545, %v491
        %v557 = vmul.f32 %v549, %v484
        %v558 = vmul.f32 %v549, %v491
        %v561 = vunpack.c.l.s4 1966171168
        %v562 = vunpack.c.0.s8 %v561
        %v563 = vlaneseq
        %v564 = vshrl.u32 %v563, 7
        %v565 = vsub.s32 %v562, %v564
        %v566 = vrot.slane %v493, %v565
        %v567 = vcombine.high %v566, %v566
        %v569 = vunpack.c.l.s4 1966171168
        %v570 = vunpack.c.0.s8 %v569
        %v571 = vlaneseq
        %v572 = vshrl.u32 %v571, 7
        %v573 = vsub.s32 %v570, %v572
        %v574 = vrot.slane %v566, %v573
        %v576 = vunpack.c.l.s4 1966171168
        %v577 = vunpack.c.0.s8 %v576
        %v578 = vlaneseq
        %v579 = vshrl.u32 %v578, 7
        %v580 = vsub.s32 %v577, %v579
        %v581 = vrot.slane %v567, %v580
        %v582 = vcombine.high %v574, %v574
        %v583 = vcombine.high %v581, %v581
        %v584 = vlaneseq
        %v585 = vshrl.u32 %v584, 7
        %v586 = vsub.s32 0, %v585
        %v587 = vrot.slane %v574, %v586
        %v588 = vlaneseq
        %v589 = vshrl.u32 %v588, 7
        %v590 = vsub.s32 0, %v589
        %v591 = vrot.slane %v581, %v590
        %v592 = vlaneseq
        %v593 = vshrl.u32 %v592, 7
        %v594 = vsub.s32 0, %v593
        %v595 = vrot.slane %v582, %v594
        %v596 = vlaneseq
        %v597 = vshrl.u32 %v596, 7
        %v598 = vsub.s32 0, %v597
        %v599 = vrot.slane %v583, %v598
        %600 = vset.pattern.permute.xlu0 0
        %601 = vperm.xlu0 %600, %v587
        %v602 = vpop.permute.xlu0 %601
        %604 = vset.pattern.permute.xlu0 0
        %605 = vperm.xlu0 %604, %v591
        %v606 = vpop.permute.xlu0 %605
        %608 = vset.pattern.permute.xlu0 0
        %609 = vperm.xlu0 %608, %v595
        %v610 = vpop.permute.xlu0 %609
        %612 = vset.pattern.permute.xlu0 0
        %613 = vperm.xlu0 %612, %v599
        %v614 = vpop.permute.xlu0 %613
        %v616 = vadd.f32 %v551, %v602
        %v617 = vadd.f32 %v552, %v602
        %v618 = vadd.f32 %v553, %v606
        %v619 = vadd.f32 %v554, %v606
        %v620 = vadd.f32 %v555, %v610
        %v621 = vadd.f32 %v556, %v610
        %v622 = vadd.f32 %v557, %v614
        %v623 = vadd.f32 %v558, %v614
        %v624 = vxor.u32 %v616, 2147483648
        %v625 = vxor.u32 %v617, 2147483648
        %v626 = vxor.u32 %v618, 2147483648
        %v627 = vxor.u32 %v619, 2147483648
        %v628 = vxor.u32 %v620, 2147483648
        %v629 = vxor.u32 %v621, 2147483648
        %v630 = vxor.u32 %v622, 2147483648
        %v631 = vxor.u32 %v623, 2147483648
        %v632 = vmul.f32 %v624, 1.442695
        %v633 = vpow.pop %v632
        %v634 = vmul.f32 %v625, 1.442695
        %v635 = vpow.pop %v634
        %v636 = vmul.f32 %v626, 1.442695
        %v637 = vpow.pop %v636
        %v638 = vmul.f32 %v627, 1.442695
        %v639 = vpow.pop %v638
        %v640 = vmul.f32 %v628, 1.442695
        %v641 = vpow.pop %v640
        %v642 = vmul.f32 %v629, 1.442695
        %v643 = vpow.pop %v642
        %v644 = vmul.f32 %v630, 1.442695
        %v645 = vpow.pop %v644
        %v646 = vmul.f32 %v631, 1.442695
        %v647 = vpow.pop %v646
        %v648 = vadd.f32 %v633, 1.0
        %v649 = vadd.f32 %v635, 1.0
        %v650 = vadd.f32 %v637, 1.0
        %v651 = vadd.f32 %v639, 1.0
        %v652 = vadd.f32 %v641, 1.0
        %v653 = vadd.f32 %v643, 1.0
        %v654 = vadd.f32 %v645, 1.0
        %v655 = vadd.f32 %v647, 1.0
        %v656 = vrcp.pop %v648
        %v657 = vmul.f32 1.0, %v656
        %v658 = vrcp.pop %v649
        %v659 = vmul.f32 1.0, %v658
        %v660 = vrcp.pop %v650
        %v661 = vmul.f32 1.0, %v660
        %v662 = vrcp.pop %v651
        %v663 = vmul.f32 1.0, %v662
        %v664 = vrcp.pop %v652
        %v665 = vmul.f32 1.0, %v664
        %v666 = vrcp.pop %v653
        %v667 = vmul.f32 1.0, %v666
        %v668 = vrcp.pop %v654
        %v669 = vmul.f32 1.0, %v668
        %v670 = vrcp.pop %v655
        %v671 = vmul.f32 1.0, %v670
        %v672 = vld [vmem:[%s276] sm:$0xff]
        %v673 = vld [vmem:[%s276 + $0x8] sm:$0xff]
        %v674 = vld [vmem:[%s276 + $0x10] sm:$0xff]
        %v675 = vld [vmem:[%s276 + $0x18] sm:$0xff]
        %v676 = vld [vmem:[%s276 + $0x20] sm:$0xff]
        %v677 = vld [vmem:[%s276 + $0x28] sm:$0xff]
        %v678 = vld [vmem:[%s276 + $0x30] sm:$0xff]
        %v679 = vld [vmem:[%s276 + $0x38] sm:$0xff]
        %688 = vrot.lane.b32.xlu0 %v657, 126
        %v689 = vpop.permute.xlu0 %688
        %690 = vrot.lane.b32.xlu0 %v659, 126
        %v691 = vpop.permute.xlu0 %690
        %692 = vrot.lane.b32.xlu0 %v661, 126
        %v693 = vpop.permute.xlu0 %692
        %694 = vrot.lane.b32.xlu0 %v663, 126
        %v695 = vpop.permute.xlu0 %694
        %696 = vrot.lane.b32.xlu0 %v665, 126
        %v697 = vpop.permute.xlu0 %696
        %698 = vrot.lane.b32.xlu0 %v667, 126
        %v699 = vpop.permute.xlu0 %698
        %700 = vrot.lane.b32.xlu0 %v669, 126
        %v701 = vpop.permute.xlu0 %700
        %702 = vrot.lane.b32.xlu0 %v671, 126
        %v703 = vpop.permute.xlu0 %702
        %v712 = vmul.f32 %v672, %v689
        %v713 = vmul.f32 %v673, %v691
        %v714 = vmul.f32 %v674, %v693
        %v715 = vmul.f32 %v675, %v695
        %v716 = vmul.f32 %v676, %v697
        %v717 = vmul.f32 %v677, %v699
        %v718 = vmul.f32 %v678, %v701
        %v719 = vmul.f32 %v679, %v703
        %720 = vst.msk [vmem:[%s313] sm:$0xff] %vm334, %v712
        %721 = vst.msk [vmem:[%s313 + $0x8] sm:$0xff] %vm334, %v713
        %722 = vst.msk [vmem:[%s313 + $0x10] sm:$0xff] %vm334, %v714
        %723 = vst.msk [vmem:[%s313 + $0x18] sm:$0xff] %vm334, %v715
        %724 = vst.msk [vmem:[%s313 + $0x20] sm:$0xff] %vm334, %v716
        %725 = vst.msk [vmem:[%s313 + $0x28] sm:$0xff] %vm334, %v717
        %726 = vst.msk [vmem:[%s313 + $0x30] sm:$0xff] %vm334, %v718
        %727 = vst.msk [vmem:[%s313 + $0x38] sm:$0xff] %vm334, %v719
        %s728 = sand.u32 %s163, 1
        %s729 = scalar_lea.sflag [#allocation4], %s728
        %s730 = sand.u32 %s163, 1
        %s731 = smul.addr %s730, 64
        %s732 = scalar_lea.vmem [#allocation7], %s731
        // Predicated region
        $region45: #{tpu_custom_call.1} parent=35 // pred_check
          %p733 = pneg %p173
        $region46: #{tpu_custom_call.1} parent=35 // pred_check_branch
          %735 = sbr.rel (%p733) target = $region48
        $region47: #{tpu_custom_call.1} parent=35 // pred_region
          %s736 = smul.u32 4, %s31
          %s737 = smul.u32 2, %s30
          %s739 = ssub.s32 1024, 1024
          %740 = vsyncadd %s729, %s739
          %s741 = smul.addr %s736, 2
          %s742 = sadd.s32 %s737, %s741
          %s743 = smul.addr %s29, 8
          %s744 = sadd.s32 %s742, %s743
          %s745 = smul.addr %s744, 128
          %s746 = scalar_lea.hbm %s4, %s745
          %s747 = sshll.u32 %s732, 4
          %s748 = int_to_ptr.vmem [resolvable:$true] %s747
          %753 = dma.vmem_to_hbm [thread:$0]  %s748, 1024, %s746, %s729, 128, 128, 8
        $region48: #{tpu_custom_call.1} parent=35 // pred_fallthru
          _
      $region36: #{tpu_custom_call.1} parent=5 // pred_fallthru
        _
      %p754 = scmp.le.s32.totalorder 2, %s19
      // Predicated region
      $region49: #{tpu_custom_call.1} parent=5 // pred_check
        %p755 = pneg %p754
      $region50: #{tpu_custom_call.1} parent=5 // pred_check_branch
        %757 = sbr.rel (%p755) target = $region52
      $region51: #{tpu_custom_call.1} parent=5 // pred_region
        %s758 = ssub.s32 %s19, 2
        // Predicated region
        $region53: #{tpu_custom_call.1} parent=51 // pred_check
          %p759 = pneg %p179
        $region54: #{tpu_custom_call.1} parent=51 // pred_check_branch
          %761 = sbr.rel (%p759) target = $region56
        $region55: #{tpu_custom_call.1} parent=51 // pred_region
          %s762 = sand.u32 %s164, 1
          %s763 = scalar_lea.sflag [#allocation4], %s762
          %s764 = sand.u32 %s164, 1
          %s765 = smul.addr %s764, 64
          %s766 = scalar_lea.vmem [#allocation7], %s765
          %767 = dma.done %s763, 1024
        $region56: #{tpu_custom_call.1} parent=51 // pred_fallthru
          _
      $region52: #{tpu_custom_call.1} parent=5 // pred_fallthru
        _
    $region6: #{tpu_custom_call.1} parent=1 // loop_footer
      %s23 = sadd.s32 1, %s19
    $region7: #{tpu_custom_call.1} parent=1 // loop_footer_branch
      %18 = sbr.rel target = $region3
    $region8: #{tpu_custom_call.1} parent=1 // loop_exit
      _
    %768 = vsyncpa [#allocation3], 1
    %s769 = scalar_lea.sflag [#allocation3], 1
    %770 = vsyncpa %s769, 1
    %771 = vsyncpa [#allocation6], 1
    %s772 = scalar_lea.sflag [#allocation6], 1
    %773 = vsyncpa %s772, 1
    %774 = vsyncpa [#allocation4], 1
    %s775 = scalar_lea.sflag [#allocation4], 1
    %776 = vsyncpa %s775, 1

</llo_original>
